<compile_context>
chip_gen: v7x
topology: tpu7x:2x2x1
jax: 0.10.0
libtpu: 0.0.40
codegen_flags: <defaults>
</compile_context>

<pallas_src>
import jax
import jax.numpy as jnp
from jax.experimental import pallas as pl
from jax.experimental.pallas import tpu as pltpu


# ----------------------------------------------------------------------------
# Kernel
# ----------------------------------------------------------------------------

def _ssam_kernel(inv_t_ref, x_ref, coords_ref, o_ref):
    """Fused softmax + expected-coordinate reduction for one tile of rows."""
    inv_t = inv_t_ref[0, 0]                           # scalar 1/temperature (SMEM)
    z = x_ref[...] * inv_t                            # (br, H*W)
    m = jnp.max(z, axis=-1, keepdims=True)            # row max (XLU)
    e = jnp.exp(z - m)                                # unnormalised softmax (EUP)
    s = jnp.sum(e, axis=-1, keepdims=True)            # (br, 1) denominators
    cx = coords_ref[0:1, :]                           # (1, H*W) x coordinates
    cy = coords_ref[1:2, :]                           # (1, H*W) y coordinates
    sx = jnp.sum(e * cx, axis=-1, keepdims=True)      # (br, 1) unnormalised E[x]
    sy = jnp.sum(e * cy, axis=-1, keepdims=True)      # (br, 1) unnormalised E[y]
    r = pl.reciprocal(s, approx=True)                 # one reciprocal per row
    # place E[x] in output column 0 and E[y] in column 1 (single full-block store)
    lane = jax.lax.broadcasted_iota(jnp.int32, o_ref.shape, 1)
    o_ref[...] = jnp.where(lane == 0, sx * r, sy * r)


# ----------------------------------------------------------------------------
# Wrapper
# ----------------------------------------------------------------------------

def _image_coordinates(h, w, normalise):
    """(2, H*W) float32: row 0 = x (column) coord, row 1 = y (row) coord."""
    xr = jnp.arange(w, dtype=jnp.float32)
    yr = jnp.arange(h, dtype=jnp.float32)
    if normalise:
        # max(..., 1) guards H==1 / W==1 (torch would divide by zero here);
        # identical to torch for any H, W >= 2.
        xr = xr / max(w - 1, 1) * 2.0 - 1.0
        yr = yr / max(h - 1, 1) * 2.0 - 1.0
    cx = jnp.broadcast_to(xr[None, :], (h, w)).reshape(1, h * w)
    cy = jnp.broadcast_to(yr[:, None], (h, w)).reshape(1, h * w)
    return jnp.concatenate([cx, cy], axis=0)


_MAX_BLOCK_BYTES = 4 * 1024 * 1024   # per-buffer cap; 2x-buffered fits all gens


def spatial_soft_argmax(x, temperature, normalise=False):
    """SpatialSoftArgmax forward: (N, C, H, W) -> (N, C, 2)."""
    n, c, h, w = x.shape
    rows, hw = n * c, h * w
    x2 = x.astype(jnp.float32).reshape(rows, hw)

    # Row tile: as large as the VMEM cap allows, multiple of 8 sublanes,
    # or the full row extent for small inputs.
    br = _MAX_BLOCK_BYTES // (hw * 4)
    br = max(8, (br // 8) * 8)
    br = min(br, 1024)
    if br >= rows:
        br = rows
    grid = (pl.cdiv(rows, br),)

    coords = _image_coordinates(h, w, normalise)                      # (2, H*W)
    inv_t = (1.0 / jnp.asarray(temperature, jnp.float32)).reshape(1, 1)

    cost = pl.CostEstimate(
        flops=8 * rows * hw,
        transcendentals=rows * hw,
        bytes_accessed=4 * (rows * hw + 2 * hw + 2 * rows + 1),
    )

    out = pl.pallas_call(
        _ssam_kernel,
        out_shape=jax.ShapeDtypeStruct((rows, 2), jnp.float32),
        grid=grid,
        in_specs=[
            pl.BlockSpec(memory_space=pltpu.MemorySpace.SMEM),        # 1/temperature
            pl.BlockSpec((br, hw), lambda i: (i, 0)),                 # activations
            pl.BlockSpec((2, hw), lambda i: (0, 0)),                  # coordinates
        ],
        out_specs=pl.BlockSpec((br, 2), lambda i: (i, 0)),
        compiler_params=pltpu.CompilerParams(
            dimension_semantics=("parallel",)),
        cost_estimate=cost,
    )(inv_t, x2, coords)
    return out.reshape(n, c, 2)


class SpatialSoftArgmax:
    """JAX/Pallas analogue of the PyTorch SpatialSoftArgmax module."""

    def __init__(self, temperature=None, normalise=False):
        # temperature is a learnt parameter when None (init = ones(1)),
        # otherwise a fixed buffer — matching the torch module.
        self.temperature = (jnp.ones((1,), jnp.float32) if temperature is None
                            else jnp.asarray([temperature], jnp.float32))
        self.normalise = normalise

    def __call__(self, x):
        return spatial_soft_argmax(x, self.temperature, self.normalise)


# ----------------------------------------------------------------------------
# Pure-JAX reference (for tolerance validation)
# ----------------------------------------------------------------------------

def spatial_soft_argmax_ref(x, temperature, normalise):
    n, c, h, w = x.shape
    p = jax.nn.softmax(x.reshape(n * c, h * w) / temperature, axis=1)
    coords = _image_coordinates(h, w, normalise)          # (2, H*W)
    out = p @ coords.T                                    # (n*c, 2)
    return out.reshape(n, c, 2)


# ----------------------------------------------------------------------------

if __name__ == "__main__":
    key = jax.random.PRNGKey(0)
    x = jax.random.normal(key, (2, 4, 16, 16), jnp.float32)   # (N, C, H, W)

    # learnt temperature (init 1.0), normalised coords — diffdagger configuration
    mod = SpatialSoftArgmax(temperature=None, normalise=True)
    out = mod(x)
    jax.block_until_ready(out)
    assert out.shape == (2, 4, 2)
    ref = spatial_soft_argmax_ref(x, mod.temperature, True)
    assert jnp.allclose(out, ref, rtol=1e-2, atol=1e-2), \
        float(jnp.max(jnp.abs(out - ref)))

    # fixed temperature, un-normalised pixel coordinates (module defaults)
    mod2 = SpatialSoftArgmax(temperature=0.5, normalise=False)
    out2 = mod2(x)
    jax.block_until_ready(out2)
    assert out2.shape == (2, 4, 2)
    ref2 = spatial_soft_argmax_ref(x, mod2.temperature, False)
    assert jnp.allclose(out2, ref2, rtol=1e-2, atol=5e-2), \
        float(jnp.max(jnp.abs(out2 - ref2)))

    print("KERNEL_OK")
</pallas_src>

<mosaic_0001>
module attributes {stable_mosaic.version = 11 : i64} {
  func.func @_ssam_kernel(%arg0: i32, %arg1: memref<1x1xf32, #tpu.memory_space<smem>>, %arg2: memref<8x256xf32, #tpu.memory_space<vmem>>, %arg3: memref<2x256xf32, #tpu.memory_space<vmem>>, %arg4: memref<8x2xf32, #tpu.memory_space<vmem>>) attributes {dimension_semantics = [#tpu.dimension_semantics<parallel>], iteration_bounds = array<i64: 1>, scalar_prefetch = 0 : i64, scratch_operands = 0 : i64, tpu.core_type = #tpu.core_type<tc>, window_params = [{transform_indices = @transform_0, window_bounds = array<i64: 1, 1>}, {transform_indices = @transform_1, window_bounds = array<i64: 8, 256>}, {pipeline_mode = #tpu.pipeline_mode<synchronous>, transform_indices = @transform_2, window_bounds = array<i64: 2, 256>}, {transform_indices = @transform_3, window_bounds = array<i64: 8, 2>}]} {
    %c0 = arith.constant 0 : index
    %c0_0 = arith.constant 0 : index
    %0 = memref.load %arg1[%c0, %c0_0] : memref<1x1xf32, #tpu.memory_space<smem>>
    %c0_1 = arith.constant 0 : index
    %c0_2 = arith.constant 0 : index
    %1 = vector.load %arg2[%c0_1, %c0_2] : memref<8x256xf32, #tpu.memory_space<vmem>>, vector<8x256xf32>
    %2 = vector.broadcast %0 : f32 to vector<8x256xf32>
    %3 = arith.mulf %1, %2 : vector<8x256xf32>
    %cst = arith.constant dense<0xFF800000> : vector<8xf32>
    %4 = vector.multi_reduction <maximumf>, %3, %cst [1] : vector<8x256xf32> to vector<8xf32>
    %5 = vector.shape_cast %4 : vector<8xf32> to vector<8x1xf32>
    %6 = vector.broadcast %5 : vector<8x1xf32> to vector<8x256xf32>
    %7 = arith.subf %3, %6 : vector<8x256xf32>
    %8 = math.exp %7 : vector<8x256xf32>
    %cst_3 = arith.constant dense<0.000000e+00> : vector<8xf32>
    %9 = vector.multi_reduction <add>, %8, %cst_3 [1] : vector<8x256xf32> to vector<8xf32>
    %10 = vector.shape_cast %9 : vector<8xf32> to vector<8x1xf32>
    %c0_4 = arith.constant 0 : index
    %c0_5 = arith.constant 0 : index
    %11 = vector.load %arg3[%c0_4, %c0_5] : memref<2x256xf32, #tpu.memory_space<vmem>>, vector<1x256xf32>
    %c1 = arith.constant 1 : index
    %c0_6 = arith.constant 0 : index
    %12 = vector.load %arg3[%c1, %c0_6] : memref<2x256xf32, #tpu.memory_space<vmem>>, vector<1x256xf32>
    %13 = vector.broadcast %11 : vector<1x256xf32> to vector<8x256xf32>
    %14 = arith.mulf %8, %13 : vector<8x256xf32>
    %cst_7 = arith.constant dense<0.000000e+00> : vector<8xf32>
    %15 = vector.multi_reduction <add>, %14, %cst_7 [1] : vector<8x256xf32> to vector<8xf32>
    %16 = vector.shape_cast %15 : vector<8xf32> to vector<8x1xf32>
    %17 = vector.broadcast %12 : vector<1x256xf32> to vector<8x256xf32>
    %18 = arith.mulf %8, %17 : vector<8x256xf32>
    %cst_8 = arith.constant dense<0.000000e+00> : vector<8xf32>
    %19 = vector.multi_reduction <add>, %18, %cst_8 [1] : vector<8x256xf32> to vector<8xf32>
    %20 = vector.shape_cast %19 : vector<8xf32> to vector<8x1xf32>
    %21 = tpu.reciprocal %10 {approx = true} : vector<8x1xf32> -> vector<8x1xf32>
    %22 = tpu.iota {dimensions = array<i32: 1>} : vector<8x2xi32>
    %c0_i32 = arith.constant 0 : i32
    %23 = vector.broadcast %c0_i32 : i32 to vector<8x2xi32>
    %24 = arith.cmpi eq, %22, %23 : vector<8x2xi32>
    %25 = arith.mulf %16, %21 : vector<8x1xf32>
    %26 = arith.mulf %20, %21 : vector<8x1xf32>
    %27 = vector.shape_cast %25 : vector<8x1xf32> to vector<8x1xf32>
    %28 = vector.broadcast %27 : vector<8x1xf32> to vector<8x2xf32>
    %29 = vector.shape_cast %26 : vector<8x1xf32> to vector<8x1xf32>
    %30 = vector.broadcast %29 : vector<8x1xf32> to vector<8x2xf32>
    %31 = arith.select %24, %28, %30 : vector<8x2xi1>, vector<8x2xf32>
    %c0_9 = arith.constant 0 : index
    %c0_10 = arith.constant 0 : index
    %32 = vector.load %arg4[%c0_9, %c0_10] : memref<8x2xf32, #tpu.memory_space<vmem>>, vector<8x2xf32>
    tpu.vector_store %arg4[%c0_9, %c0_10], %31 {strides = array<i32>} : memref<8x2xf32, #tpu.memory_space<vmem>>, vector<8x2xf32>,
    return
  }
  func.func @transform_0(%arg0: i32) -> (i32, i32) {
    %c0_i32 = arith.constant 0 : i32
    %c0_i32_0 = arith.constant 0 : i32
    %c0_i32_1 = arith.constant 0 : i32
    return %c0_i32, %c0_i32_0 : i32, i32
  }
  func.func @transform_1(%arg0: i32) -> (i32, i32) {
    %c0_i32 = arith.constant 0 : i32
    %c0_i32_0 = arith.constant 0 : i32
    return %arg0, %c0_i32 : i32, i32
  }
  func.func @transform_2(%arg0: i32) -> (i32, i32) {
    %c0_i32 = arith.constant 0 : i32
    %c0_i32_0 = arith.constant 0 : i32
    %c0_i32_1 = arith.constant 0 : i32
    return %c0_i32, %c0_i32_0 : i32, i32
  }
  func.func @transform_3(%arg0: i32) -> (i32, i32) {
    %c0_i32 = arith.constant 0 : i32
    %c0_i32_0 = arith.constant 0 : i32
    return %arg0, %c0_i32 : i32, i32
  }
}

</mosaic_0001>

<llo_original>
// kernel: tpu_custom_call.1
$region0: #{tpu_custom_call.1}
  #allocation0 [shape = 'u32[]', space=smem, size = 0x4, offset = 0x4, fixed_abs, tag = 'smem constant byte address 0x4 - core index']
  #allocation1 [shape = 'u32[144,128]{1,0:T(1,128)}', space=vmem, size = 0x12000, scoped, tag = 'internal scratch']
  #allocation2 [shape = 'f32[1,1]{1,0:T(1,128)S(6)}', space=smem, size = 0x200, scoped, tag = 'scoped memory for tpu_custom_call.1']
  %s0 = inlined_call_operand.<no memory space> [shape: f32[1,1], index: 0, kind: input, shape index: {}]
  %s1 = inlined_call_operand.hbm [shape: f32[8,256], index: 1, kind: input, shape index: {}]
  %s2 = inlined_call_operand.vmem [shape: f32[2,256], index: 2, kind: input, shape index: {}]
  %s3 = inlined_call_operand.vmem [shape: f32[8,2], index: 3, kind: output, shape index: {}]
  %s4 = sld [smem:[#allocation0]]
  $region26: #{tpu_custom_call.1} parent=0
    _
  %s6 = ssub.s32 1, %s4
  %s7 = scalar_select 0, %s6, %s4
  %8 = sst [smem:[#allocation2]] %s0
  $region1: #{tpu_custom_call.1} parent=0
    #allocation3 [shape = 'u8[8192]{0}', space=vmem, size = 0x2000, scoped, tag = 'input window, operand 1, single buffered']
    #allocation4 [shape = 's32[1]{0}', space=sflag, size = 0x4, scoped, tag = 'scoped memory for tpu_custom_call.1']
    %9 = vsyncpa [#allocation4], 0
    // Predicated region
    $region2: #{tpu_custom_call.1} parent=1 // pred_check
      _
    $region3: #{tpu_custom_call.1} parent=1 // pred_check_branch
      %11 = sbr.rel (0) target = $region5
    $region4: #{tpu_custom_call.1} parent=1 // pred_region
      _
    $region5: #{tpu_custom_call.1} parent=1 // pred_fallthru
      _
    // Predicated region
    $region6: #{tpu_custom_call.1} parent=1 // pred_check
      _
    $region7: #{tpu_custom_call.1} parent=1 // pred_check_branch
      %13 = sbr.rel (0) target = $region9
    $region8: #{tpu_custom_call.1} parent=1 // pred_region
      %s15 = ssub.s32 256, 256
      %16 = vsyncadd [#allocation4], %s15
      %s18 = sshll.u32 [#allocation3], 4
      %s19 = int_to_ptr.vmem [resolvable:$true] %s18
      %21 = dma.hbm_to_vmem [thread:$0]  %s1, 256, %s19, [#allocation4]
    $region9: #{tpu_custom_call.1} parent=1 // pred_fallthru
      _
    // Predicated region
    $region10: #{tpu_custom_call.1} parent=1 // pred_check
      _
    $region11: #{tpu_custom_call.1} parent=1 // pred_check_branch
      %23 = sbr.rel (0) target = $region13
    $region12: #{tpu_custom_call.1} parent=1 // pred_region
      _
    $region13: #{tpu_custom_call.1} parent=1 // pred_fallthru
      _
    // Predicated region
    $region14: #{tpu_custom_call.1} parent=1 // pred_check
      _
    $region15: #{tpu_custom_call.1} parent=1 // pred_check_branch
      %25 = sbr.rel (0) target = $region17
    $region16: #{tpu_custom_call.1} parent=1 // pred_region
      %26 = dma.done [#allocation4], 256
    $region17: #{tpu_custom_call.1} parent=1 // pred_fallthru
      _
    %s27 = sld [smem:[#allocation2]]
    %v28 = vld [vmem:[#allocation3] sm:$0xff]
    %v29 = vld [vmem:[#allocation3 + $0x8] sm:$0xff]
    %v30 = vstv %s27
    %v31 = vmul.f32 %v28, %v30
    %v32 = vmul.f32 %v29, %v30
    %v33 = vmax.f32 %v31, %v32
    %34 = vmax.xlane.f32.xlu0 %v33
    %v35 = vpop.xlane.xlu0 %34
    %v36 = vsub.f32 %v31, %v35
    %v37 = vsub.f32 %v32, %v35
    %v38 = vmul.f32 %v36, 1.442695
    %v39 = vpow.pop %v38
    %v40 = vmul.f32 %v37, 1.442695
    %v41 = vpow.pop %v40
    %v42 = vadd.f32 %v39, %v41
    %43 = vadd.xlane.f32.xlu0 %v42
    %v44 = vpop.xlane.xlu0 %43
    %v45 = vld [vmem:[%s2] ss:$2 sm:$0x3]
    %s46 = scalar_lea.vmem %s2, 1
    %v47 = vld [vmem:[%s46] ss:$2 sm:$0x3]
    %v49 = vlaneseq
    %v50 = vshrl.u32 %v49, 7
    %v51 = vsub.s32 0, %v50
    %v52 = vrot.slane %v45, %v51
    %v53 = vlaneseq
    %v54 = vshrl.u32 %v53, 7
    %v55 = vsub.s32 1, %v54
    %v56 = vrot.slane %v45, %v55
    %v59 = vmul.f32 %v39, %v52
    %v60 = vmul.f32 %v41, %v56
    %v61 = vadd.f32 %v59, %v60
    %62 = vadd.xlane.f32.xlu0 %v61
    %v63 = vpop.xlane.xlu0 %62
    %v65 = vlaneseq
    %v66 = vshrl.u32 %v65, 7
    %v67 = vsub.s32 0, %v66
    %v68 = vrot.slane %v47, %v67
    %v69 = vlaneseq
    %v70 = vshrl.u32 %v69, 7
    %v71 = vsub.s32 1, %v70
    %v72 = vrot.slane %v47, %v71
    %v75 = vmul.f32 %v39, %v68
    %v76 = vmul.f32 %v41, %v72
    %v77 = vadd.f32 %v75, %v76
    %78 = vadd.xlane.f32.xlu0 %v77
    %v79 = vpop.xlane.xlu0 %78
    %v80 = vrcp.pop %v44
    %v81 = vlaneseq
    %v82 = vand.u32 %v81, 127
    %vm83 = vcmp.eq.s32.totalorder %v82, 0
    %v84 = vmul.f32 %v63, %v80
    %v85 = vmul.f32 %v79, %v80
    %v86 = vsel %vm83, %v84, %v85
    %vm87 = vcmask 15360
    %88 = vst.msk [vmem:[%s3] sm:$0xff] %vm87, %v86
    // Predicated region
    $region18: #{tpu_custom_call.1} parent=1 // pred_check
      _
    $region19: #{tpu_custom_call.1} parent=1 // pred_check_branch
      %90 = sbr.rel (0) target = $region21
    $region20: #{tpu_custom_call.1} parent=1 // pred_region
      _
    $region21: #{tpu_custom_call.1} parent=1 // pred_fallthru
      _
    // Predicated region
    $region22: #{tpu_custom_call.1} parent=1 // pred_check
      _
    $region23: #{tpu_custom_call.1} parent=1 // pred_check_branch
      %92 = sbr.rel (0) target = $region25
    $region24: #{tpu_custom_call.1} parent=1 // pred_region
      _
    $region25: #{tpu_custom_call.1} parent=1 // pred_fallthru
      _
    %93 = vsyncpa [#allocation4], 1

</llo_original>
